<compile_context>
chip_gen: v7x
topology: tpu7x:2x2x1
jax: 0.10.0
libtpu: 0.0.40
codegen_flags: <defaults>
</compile_context>

<pallas_src>
import functools

import jax
import jax.numpy as jnp
from jax.experimental import pallas as pl
from jax.experimental.pallas import tpu as pltpu


_LANES = 128                  # vreg lane width: keep last dim lane-dense
_SUBLANES = 8                 # sublane granularity for block rows
_MIN_KERNEL_BYTES = 1 << 20   # below ~1 MiB, dispatch overhead dominates -> return z


def _round_up(x, m):
    return (x + m - 1) // m * m


def _tile_caps():
    """Per-generation (per-buffer tile byte cap, scoped vmem_limit_bytes)."""
    try:
        vmem = pltpu.get_tpu_info().vmem_capacity_bytes
    except Exception:  # pragma: no cover - conservative fallback
        vmem = 64 << 20
    if vmem >= (128 << 20):
        # v5e / v6e: 128 MiB physical VMEM. 8 MiB tiles x 4 double-buffered
        # windows (in + out) = 32 MiB, so raise the scoped limit (v5e default
        # is only 16 MiB) to 48 MiB.
        return 8 << 20, 48 << 20
    # v7x: 64 MiB physical / 32 MiB scoped default per TC. Keep tiles <= 4 MiB
    # (16 MiB total buffering) and stay at the default scoped limit.
    return 4 << 20, 32 << 20


def _pick_tile_rows(rows, itemsize):
    """Near-divisor tile_rows (multiple of 8) with at least 2 grid steps."""
    tile_bytes_cap, _ = _tile_caps()
    bytes_per_row = _LANES * itemsize
    cap_rows = max(_SUBLANES,
                   (tile_bytes_cap // bytes_per_row) // _SUBLANES * _SUBLANES)
    # Aim for >= 2 tiles (v7x megacore sharding) and a tile that nearly divides
    # `rows`, so the ragged last block wastes less than one tile of DMA.
    n_tiles = max(2, pl.cdiv(rows, cap_rows))
    tile_rows = min(cap_rows, _round_up(pl.cdiv(rows, n_tiles), _SUBLANES))
    return max(_SUBLANES, tile_rows)


def _copy_kernel(z_ref, o_ref):
    # Empty nn.Sequential == identity: move the lane-dense tile through VMEM.
    o_ref[...] = z_ref[...]


@functools.partial(jax.jit, static_argnums=(1, 2))
def _pallas_copy_2d(x, tile_rows, vmem_limit_bytes):
    rows = x.shape[0]
    grid = (pl.cdiv(rows, tile_rows),)  # ragged last block handled by Pallas
    return pl.pallas_call(
        _copy_kernel,
        out_shape=jax.ShapeDtypeStruct(x.shape, x.dtype),
        grid=grid,
        in_specs=[pl.BlockSpec((tile_rows, _LANES), lambda i: (i, 0))],
        out_specs=pl.BlockSpec((tile_rows, _LANES), lambda i: (i, 0)),
        compiler_params=pltpu.CompilerParams(
            # Independent row tiles: pipelined DMA overlap + v7x megacore sharding.
            dimension_semantics=("parallel",),
            vmem_limit_bytes=vmem_limit_bytes,
        ),
    )(x)


def generator_forward(z):
    """Generator.forward: self.G is an empty nn.Sequential, i.e. identity.

    Optimal implementation: return z (no HBM traffic, no kernel dispatch).
    """
    # TODO(synk): the template's _blocks() is empty; when the real DCGAN
    # ConvTranspose2d stack is added, replace this with the fused Pallas path.
    return z


def generator_forward_pallas(z, *, min_kernel_bytes=_MIN_KERNEL_BYTES):
    """Template identity-copy via Pallas (fusion anchor for the future stack)."""
    n = z.size
    itemsize = jnp.dtype(z.dtype).itemsize
    rows, lane_rem = divmod(n, _LANES)
    if (n * itemsize < min_kernel_bytes
            or lane_rem != 0
            or rows % _SUBLANES != 0):
        # Tiny or unaligned latents: no padding round trip, no kernel overhead;
        # the module is identity so returning z is exact.
        return z
    x = z.reshape(rows, _LANES)                 # contiguous view, lane-dense
    tile_rows = _pick_tile_rows(rows, itemsize)
    _, vmem_limit = _tile_caps()
    out = _pallas_copy_2d(x, tile_rows, vmem_limit)
    return out.reshape(z.shape)


if __name__ == "__main__":
    key = jax.random.PRNGKey(0)

    # Small NCHW latent matching the PyTorch usage: (B, z_dim, 1, 1).
    z_small = jax.random.normal(key, (2, 64, 1, 1), dtype=jnp.float32)

    # Default (optimal) forward: pure identity.
    out_small = jax.block_until_ready(generator_forward(z_small))
    assert out_small.shape == z_small.shape and out_small.dtype == z_small.dtype
    assert bool(jnp.array_equal(out_small, z_small)), "identity mismatch (small)"

    # Pallas path on the tiny latent takes the small-input bypass (returns z).
    out_bypass = jax.block_until_ready(generator_forward_pallas(z_small))
    assert bool(jnp.array_equal(out_bypass, z_small)), "bypass mismatch (small)"

    # Exercise the Pallas copy kernel itself on an aligned latent batch with the
    # size threshold lowered, so the multi-step parallel grid actually runs.
    z_big = jax.random.normal(key, (256, 512, 1, 1), dtype=jnp.float32)
    out_big = jax.block_until_ready(
        generator_forward_pallas(z_big, min_kernel_bytes=0))
    assert out_big.shape == z_big.shape and out_big.dtype == z_big.dtype
    assert bool(jnp.array_equal(out_big, z_big)), "identity mismatch (big)"

    print("KERNEL_OK")
</pallas_src>

<mosaic_0001>
module attributes {stable_mosaic.version = 11 : i64} {
  func.func @_copy_kernel(%arg0: i32, %arg1: memref<512x128xf32, #tpu.memory_space<vmem>>, %arg2: memref<512x128xf32, #tpu.memory_space<vmem>>) attributes {dimension_semantics = [#tpu.dimension_semantics<parallel>], iteration_bounds = array<i64: 2>, scalar_prefetch = 0 : i64, scratch_operands = 0 : i64, tpu.core_type = #tpu.core_type<tc>, window_params = [{transform_indices = @transform_0, window_bounds = array<i64: 512, 128>}, {transform_indices = @transform_1, window_bounds = array<i64: 512, 128>}]} {
    %c0 = arith.constant 0 : index
    %c0_0 = arith.constant 0 : index
    %0 = vector.load %arg1[%c0, %c0_0] : memref<512x128xf32, #tpu.memory_space<vmem>>, vector<512x128xf32>
    %c0_1 = arith.constant 0 : index
    %c0_2 = arith.constant 0 : index
    %1 = vector.load %arg2[%c0_1, %c0_2] : memref<512x128xf32, #tpu.memory_space<vmem>>, vector<512x128xf32>
    tpu.vector_store %arg2[%c0_1, %c0_2], %0 {strides = array<i32>} : memref<512x128xf32, #tpu.memory_space<vmem>>, vector<512x128xf32>,
    return
  }
  func.func @transform_0(%arg0: i32) -> (i32, i32) {
    %c0_i32 = arith.constant 0 : i32
    %c0_i32_0 = arith.constant 0 : i32
    return %arg0, %c0_i32 : i32, i32
  }
  func.func @transform_1(%arg0: i32) -> (i32, i32) {
    %c0_i32 = arith.constant 0 : i32
    %c0_i32_0 = arith.constant 0 : i32
    return %arg0, %c0_i32 : i32, i32
  }
}

</mosaic_0001>

<llo_original>
// kernel: _pallas_copy_2d.1
$region0: #{_pallas_copy_2d.1}
  #allocation0 [shape = 'u32[]', space=smem, size = 0x4, offset = 0x4, fixed_abs, tag = 'smem constant byte address 0x4 - core index']
  #allocation1 [shape = 'u32[144,128]{1,0:T(1,128)}', space=vmem, size = 0x12000, scoped, tag = 'internal scratch']
  %s0 = inlined_call_operand.hbm [shape: f32[1024,128], index: 0, kind: input, shape index: {}]
  %s1 = inlined_call_operand.hbm [shape: f32[1024,128], index: 1, kind: output, shape index: {}]
  %s2 = sld [smem:[#allocation0]]
  $region41: #{_pallas_copy_2d.1} parent=0
    _
  %s4 = ssub.s32 1, %s2
  %s5 = scalar_select 0, %s4, %s2
  $region1: #{_pallas_copy_2d.1} parent=0
    #allocation2 [shape = 'u8[524288]{0}', space=vmem, size = 0x80000, scoped, tag = 'input window, operand 0']
    #allocation3 [shape = 's32[2]{0}', space=sflag, size = 0x8, scoped, tag = 'scoped memory for _pallas_copy_2d.1']
    #allocation4 [shape = 's32[2]{0}', space=sflag, size = 0x8, scoped, tag = 'scoped memory for _pallas_copy_2d.1']
    #allocation5 [shape = 'u8[524288]{0}', space=vmem, size = 0x80000, scoped, tag = 'output window, operand 0']
    %6 = vsyncpa [#allocation3], 0
    %s7 = scalar_lea.sflag [#allocation3], 1
    %8 = vsyncpa %s7, 0
    %9 = vsyncpa [#allocation4], 0
    %s10 = scalar_lea.sflag [#allocation4], 1
    %11 = vsyncpa %s10, 0
    loop: start=0, step=1, limit=4
    $region2: #{_pallas_copy_2d.1} parent=1 // loop_pre_header
      _
    $region3: #{_pallas_copy_2d.1} parent=1 // loop_header
      %s13 = sphi 0, %s17
      %p14 = scmp.ge.s32.totalorder %s13, 4
      %s23 = sphi 0, %s25
      %s26 = sphi 0, %s23
      %s27 = sphi 0, %s26
      %s43 = sphi 0, %s27
      %s49 = sphi 0, %s51
      %s52 = sphi 0, %s49
      %s53 = sphi 0, %s52
      %s69 = sphi 0, %s53
    $region4: #{_pallas_copy_2d.1} parent=1 // loop_header_branch
      %16 = sbr.rel (%p14) target = $region8
    $region5: #{_pallas_copy_2d.1} parent=1 // loop_body
      %s18 = ssub.s32 %s13, 1
      %s19 = ssub.s32 %s13, 2
      %s20 = sadd.s32 %s13, 1
      %s21 = ssub.s32 %s13, %s20
      %p22 = scmp.eq.s32.totalorder %s21, 0
      %s24 = sadd.s32 %s23, 1
      %s25 = scalar_select %p22, %s23, %s24
      %p28 = pneg %p22
      %p29 = scmp.eq.s32.totalorder %s13, 1
      %p30 = por %p28, %p29
      %p31 = scmp.ne.s32.totalorder %s23, %s26
      %p32 = scmp.eq.s32.totalorder %s13, 0
      %p33 = por %p31, %p32
      %p34 = scmp.ne.s32.totalorder %s23, %s26
      %p35 = scmp.eq.s32.totalorder %s18, 1
      %p36 = por %p34, %p35
      %p37 = scmp.ne.s32.totalorder %s26, %s27
      %p38 = scmp.eq.s32.totalorder %s18, 0
      %p39 = por %p37, %p38
      %p40 = scmp.ne.s32.totalorder %s26, %s27
      %p41 = scmp.eq.s32.totalorder %s19, 1
      %p42 = por %p40, %p41
      %p44 = scmp.ne.s32.totalorder %s27, %s43
      %p45 = scmp.eq.s32.totalorder %s19, 0
      %p46 = por %p44, %p45
      %s47 = ssub.s32 %s13, %s20
      %p48 = scmp.eq.s32.totalorder %s47, 0
      %s50 = sadd.s32 %s49, 1
      %s51 = scalar_select %p48, %s49, %s50
      %p54 = pneg %p48
      %p55 = scmp.eq.s32.totalorder %s13, 1
      %p56 = por %p54, %p55
      %p57 = scmp.ne.s32.totalorder %s49, %s52
      %p58 = scmp.eq.s32.totalorder %s13, 0
      %p59 = por %p57, %p58
      %p60 = scmp.ne.s32.totalorder %s49, %s52
      %p61 = scmp.eq.s32.totalorder %s18, 1
      %p62 = por %p60, %p61
      %p63 = scmp.ne.s32.totalorder %s52, %s53
      %p64 = scmp.eq.s32.totalorder %s18, 0
      %p65 = por %p63, %p64
      %p66 = scmp.ne.s32.totalorder %s52, %s53
      %p67 = scmp.eq.s32.totalorder %s19, 1
      %p68 = por %p66, %p67
      %p70 = scmp.ne.s32.totalorder %s53, %s69
      %p71 = scmp.eq.s32.totalorder %s19, 0
      %p72 = por %p70, %p71
      %p73 = scmp.le.s32.totalorder 1, %s13
      %p74 = scmp.lt.s32.totalorder %s13, 3
      %p75 = pnand %p73, %p74
      %p76 = pneg %p75
      // Predicated region
      $region9: #{_pallas_copy_2d.1} parent=5 // pred_check
        _
      $region10: #{_pallas_copy_2d.1} parent=5 // pred_check_branch
        %78 = sbr.rel (%p75) target = $region12
      $region11: #{_pallas_copy_2d.1} parent=5 // pred_region
        %s79 = ssub.s32 %s13, 1
      $region12: #{_pallas_copy_2d.1} parent=5 // pred_fallthru
        _
      %p80 = scmp.lt.s32.totalorder %s13, 2
      // Predicated region
      $region13: #{_pallas_copy_2d.1} parent=5 // pred_check
        %p81 = pneg %p80
      $region14: #{_pallas_copy_2d.1} parent=5 // pred_check_branch
        %83 = sbr.rel (%p81) target = $region16
      $region15: #{_pallas_copy_2d.1} parent=5 // pred_region
        // Predicated region
        $region17: #{_pallas_copy_2d.1} parent=15 // pred_check
          %p84 = pneg %p33
        $region18: #{_pallas_copy_2d.1} parent=15 // pred_check_branch
          %86 = sbr.rel (%p84) target = $region20
        $region19: #{_pallas_copy_2d.1} parent=15 // pred_region
          %s87 = sand.u32 %s23, 1
          %s88 = scalar_lea.sflag [#allocation3], %s87
          %s89 = sand.u32 %s23, 1
          %s90 = smul.addr %s89, 512
          %s91 = scalar_lea.vmem [#allocation2], %s90
          %s92 = smul.u32 64, %s13
          %s94 = ssub.s32 8192, 8192
          %95 = vsyncadd %s88, %s94
          %s96 = smul.addr %s92, 128
          %s97 = scalar_lea.hbm %s0, %s96
          %s98 = sshll.u32 %s91, 4
          %s99 = int_to_ptr.vmem [resolvable:$true] %s98
          %104 = dma.hbm_to_vmem [thread:$0]  %s97, 8192, %s99, %s88, 128, 128, 8
        $region20: #{_pallas_copy_2d.1} parent=15 // pred_fallthru
          _
      $region16: #{_pallas_copy_2d.1} parent=5 // pred_fallthru
        _
      %p105 = scmp.le.s32.totalorder 1, %s13
      %p106 = scmp.lt.s32.totalorder %s13, 3
      %p107 = pnand %p105, %p106
      %p108 = pneg %p107
      // Predicated region
      $region21: #{_pallas_copy_2d.1} parent=5 // pred_check
        _
      $region22: #{_pallas_copy_2d.1} parent=5 // pred_check_branch
        %110 = sbr.rel (%p107) target = $region24
      $region23: #{_pallas_copy_2d.1} parent=5 // pred_region
        %s111 = ssub.s32 %s13, 1
        %s112 = sand.u32 %s26, 1
        %s113 = scalar_lea.sflag [#allocation3], %s112
        %s114 = sand.u32 %s26, 1
        %s115 = smul.addr %s114, 512
        %s116 = scalar_lea.vmem [#allocation2], %s115
        // Predicated region
        $region25: #{_pallas_copy_2d.1} parent=23 // pred_check
          %p117 = pneg %p39
        $region26: #{_pallas_copy_2d.1} parent=23 // pred_check_branch
          %119 = sbr.rel (%p117) target = $region28
        $region27: #{_pallas_copy_2d.1} parent=23 // pred_region
          %120 = dma.done %s113, 8192
        $region28: #{_pallas_copy_2d.1} parent=23 // pred_fallthru
          _
        %s121 = sand.u32 %s26, 1
        %s122 = scalar_lea.sflag [#allocation3], %s121
        %s123 = sand.u32 %s26, 1
        %s124 = smul.addr %s123, 512
        %s125 = scalar_lea.vmem [#allocation2], %s124
        %p126 = pneg %p39
        %p127 = pneg %p36
        %p128 = pneg %p65
        %p129 = pneg %p62
        %s130 = sand.u32 %s52, 1
        %s131 = scalar_lea.sflag [#allocation4], %s130
        %s132 = sand.u32 %s52, 1
        %s133 = smul.addr %s132, 512
        %s134 = scalar_lea.vmem [#allocation5], %s133
        %s135 = smul.u32 64, %s18
        %s136 = smul.u32 64, %s18
        %v137 = vld [vmem:[%s116] sm:$0xff]
        %v138 = vld [vmem:[%s116 + $0x8] sm:$0xff]
        %v139 = vld [vmem:[%s116 + $0x10] sm:$0xff]
        %v140 = vld [vmem:[%s116 + $0x18] sm:$0xff]
        %v141 = vld [vmem:[%s116 + $0x20] sm:$0xff]
        %v142 = vld [vmem:[%s116 + $0x28] sm:$0xff]
        %v143 = vld [vmem:[%s116 + $0x30] sm:$0xff]
        %v144 = vld [vmem:[%s116 + $0x38] sm:$0xff]
        %v145 = vld [vmem:[%s116 + $0x40] sm:$0xff]
        %v146 = vld [vmem:[%s116 + $0x48] sm:$0xff]
        %v147 = vld [vmem:[%s116 + $0x50] sm:$0xff]
        %v148 = vld [vmem:[%s116 + $0x58] sm:$0xff]
        %v149 = vld [vmem:[%s116 + $0x60] sm:$0xff]
        %v150 = vld [vmem:[%s116 + $0x68] sm:$0xff]
        %v151 = vld [vmem:[%s116 + $0x70] sm:$0xff]
        %v152 = vld [vmem:[%s116 + $0x78] sm:$0xff]
        %v153 = vld [vmem:[%s116 + $0x80] sm:$0xff]
        %v154 = vld [vmem:[%s116 + $0x88] sm:$0xff]
        %v155 = vld [vmem:[%s116 + $0x90] sm:$0xff]
        %v156 = vld [vmem:[%s116 + $0x98] sm:$0xff]
        %v157 = vld [vmem:[%s116 + $0xa0] sm:$0xff]
        %v158 = vld [vmem:[%s116 + $0xa8] sm:$0xff]
        %v159 = vld [vmem:[%s116 + $0xb0] sm:$0xff]
        %v160 = vld [vmem:[%s116 + $0xb8] sm:$0xff]
        %v161 = vld [vmem:[%s116 + $0xc0] sm:$0xff]
        %v162 = vld [vmem:[%s116 + $0xc8] sm:$0xff]
        %v163 = vld [vmem:[%s116 + $0xd0] sm:$0xff]
        %v164 = vld [vmem:[%s116 + $0xd8] sm:$0xff]
        %v165 = vld [vmem:[%s116 + $0xe0] sm:$0xff]
        %v166 = vld [vmem:[%s116 + $0xe8] sm:$0xff]
        %v167 = vld [vmem:[%s116 + $0xf0] sm:$0xff]
        %v168 = vld [vmem:[%s116 + $0xf8] sm:$0xff]
        %v169 = vld [vmem:[%s116 + $0x100] sm:$0xff]
        %v170 = vld [vmem:[%s116 + $0x108] sm:$0xff]
        %v171 = vld [vmem:[%s116 + $0x110] sm:$0xff]
        %v172 = vld [vmem:[%s116 + $0x118] sm:$0xff]
        %v173 = vld [vmem:[%s116 + $0x120] sm:$0xff]
        %v174 = vld [vmem:[%s116 + $0x128] sm:$0xff]
        %v175 = vld [vmem:[%s116 + $0x130] sm:$0xff]
        %v176 = vld [vmem:[%s116 + $0x138] sm:$0xff]
        %v177 = vld [vmem:[%s116 + $0x140] sm:$0xff]
        %v178 = vld [vmem:[%s116 + $0x148] sm:$0xff]
        %v179 = vld [vmem:[%s116 + $0x150] sm:$0xff]
        %v180 = vld [vmem:[%s116 + $0x158] sm:$0xff]
        %v181 = vld [vmem:[%s116 + $0x160] sm:$0xff]
        %v182 = vld [vmem:[%s116 + $0x168] sm:$0xff]
        %v183 = vld [vmem:[%s116 + $0x170] sm:$0xff]
        %v184 = vld [vmem:[%s116 + $0x178] sm:$0xff]
        %v185 = vld [vmem:[%s116 + $0x180] sm:$0xff]
        %v186 = vld [vmem:[%s116 + $0x188] sm:$0xff]
        %v187 = vld [vmem:[%s116 + $0x190] sm:$0xff]
        %v188 = vld [vmem:[%s116 + $0x198] sm:$0xff]
        %v189 = vld [vmem:[%s116 + $0x1a0] sm:$0xff]
        %v190 = vld [vmem:[%s116 + $0x1a8] sm:$0xff]
        %v191 = vld [vmem:[%s116 + $0x1b0] sm:$0xff]
        %v192 = vld [vmem:[%s116 + $0x1b8] sm:$0xff]
        %v193 = vld [vmem:[%s116 + $0x1c0] sm:$0xff]
        %v194 = vld [vmem:[%s116 + $0x1c8] sm:$0xff]
        %v195 = vld [vmem:[%s116 + $0x1d0] sm:$0xff]
        %v196 = vld [vmem:[%s116 + $0x1d8] sm:$0xff]
        %v197 = vld [vmem:[%s116 + $0x1e0] sm:$0xff]
        %v198 = vld [vmem:[%s116 + $0x1e8] sm:$0xff]
        %v199 = vld [vmem:[%s116 + $0x1f0] sm:$0xff]
        %v200 = vld [vmem:[%s116 + $0x1f8] sm:$0xff]
        %201 = vst [vmem:[%s134] sm:$0xff] %v137
        %202 = vst [vmem:[%s134 + $0x8] sm:$0xff] %v138
        %203 = vst [vmem:[%s134 + $0x10] sm:$0xff] %v139
        %204 = vst [vmem:[%s134 + $0x18] sm:$0xff] %v140
        %205 = vst [vmem:[%s134 + $0x20] sm:$0xff] %v141
        %206 = vst [vmem:[%s134 + $0x28] sm:$0xff] %v142
        %207 = vst [vmem:[%s134 + $0x30] sm:$0xff] %v143
        %208 = vst [vmem:[%s134 + $0x38] sm:$0xff] %v144
        %209 = vst [vmem:[%s134 + $0x40] sm:$0xff] %v145
        %210 = vst [vmem:[%s134 + $0x48] sm:$0xff] %v146
        %211 = vst [vmem:[%s134 + $0x50] sm:$0xff] %v147
        %212 = vst [vmem:[%s134 + $0x58] sm:$0xff] %v148
        %213 = vst [vmem:[%s134 + $0x60] sm:$0xff] %v149
        %214 = vst [vmem:[%s134 + $0x68] sm:$0xff] %v150
        %215 = vst [vmem:[%s134 + $0x70] sm:$0xff] %v151
        %216 = vst [vmem:[%s134 + $0x78] sm:$0xff] %v152
        %217 = vst [vmem:[%s134 + $0x80] sm:$0xff] %v153
        %218 = vst [vmem:[%s134 + $0x88] sm:$0xff] %v154
        %219 = vst [vmem:[%s134 + $0x90] sm:$0xff] %v155
        %220 = vst [vmem:[%s134 + $0x98] sm:$0xff] %v156
        %221 = vst [vmem:[%s134 + $0xa0] sm:$0xff] %v157
        %222 = vst [vmem:[%s134 + $0xa8] sm:$0xff] %v158
        %223 = vst [vmem:[%s134 + $0xb0] sm:$0xff] %v159
        %224 = vst [vmem:[%s134 + $0xb8] sm:$0xff] %v160
        %225 = vst [vmem:[%s134 + $0xc0] sm:$0xff] %v161
        %226 = vst [vmem:[%s134 + $0xc8] sm:$0xff] %v162
        %227 = vst [vmem:[%s134 + $0xd0] sm:$0xff] %v163
        %228 = vst [vmem:[%s134 + $0xd8] sm:$0xff] %v164
        %229 = vst [vmem:[%s134 + $0xe0] sm:$0xff] %v165
        %230 = vst [vmem:[%s134 + $0xe8] sm:$0xff] %v166
        %231 = vst [vmem:[%s134 + $0xf0] sm:$0xff] %v167
        %232 = vst [vmem:[%s134 + $0xf8] sm:$0xff] %v168
        %233 = vst [vmem:[%s134 + $0x100] sm:$0xff] %v169
        %234 = vst [vmem:[%s134 + $0x108] sm:$0xff] %v170
        %235 = vst [vmem:[%s134 + $0x110] sm:$0xff] %v171
        %236 = vst [vmem:[%s134 + $0x118] sm:$0xff] %v172
        %237 = vst [vmem:[%s134 + $0x120] sm:$0xff] %v173
        %238 = vst [vmem:[%s134 + $0x128] sm:$0xff] %v174
        %239 = vst [vmem:[%s134 + $0x130] sm:$0xff] %v175
        %240 = vst [vmem:[%s134 + $0x138] sm:$0xff] %v176
        %241 = vst [vmem:[%s134 + $0x140] sm:$0xff] %v177
        %242 = vst [vmem:[%s134 + $0x148] sm:$0xff] %v178
        %243 = vst [vmem:[%s134 + $0x150] sm:$0xff] %v179
        %244 = vst [vmem:[%s134 + $0x158] sm:$0xff] %v180
        %245 = vst [vmem:[%s134 + $0x160] sm:$0xff] %v181
        %246 = vst [vmem:[%s134 + $0x168] sm:$0xff] %v182
        %247 = vst [vmem:[%s134 + $0x170] sm:$0xff] %v183
        %248 = vst [vmem:[%s134 + $0x178] sm:$0xff] %v184
        %249 = vst [vmem:[%s134 + $0x180] sm:$0xff] %v185
        %250 = vst [vmem:[%s134 + $0x188] sm:$0xff] %v186
        %251 = vst [vmem:[%s134 + $0x190] sm:$0xff] %v187
        %252 = vst [vmem:[%s134 + $0x198] sm:$0xff] %v188
        %253 = vst [vmem:[%s134 + $0x1a0] sm:$0xff] %v189
        %254 = vst [vmem:[%s134 + $0x1a8] sm:$0xff] %v190
        %255 = vst [vmem:[%s134 + $0x1b0] sm:$0xff] %v191
        %256 = vst [vmem:[%s134 + $0x1b8] sm:$0xff] %v192
        %257 = vst [vmem:[%s134 + $0x1c0] sm:$0xff] %v193
        %258 = vst [vmem:[%s134 + $0x1c8] sm:$0xff] %v194
        %259 = vst [vmem:[%s134 + $0x1d0] sm:$0xff] %v195
        %260 = vst [vmem:[%s134 + $0x1d8] sm:$0xff] %v196
        %261 = vst [vmem:[%s134 + $0x1e0] sm:$0xff] %v197
        %262 = vst [vmem:[%s134 + $0x1e8] sm:$0xff] %v198
        %263 = vst [vmem:[%s134 + $0x1f0] sm:$0xff] %v199
        %264 = vst [vmem:[%s134 + $0x1f8] sm:$0xff] %v200
        %s265 = sand.u32 %s52, 1
        %s266 = scalar_lea.sflag [#allocation4], %s265
        %s267 = sand.u32 %s52, 1
        %s268 = smul.addr %s267, 512
        %s269 = scalar_lea.vmem [#allocation5], %s268
        // Predicated region
        $region29: #{_pallas_copy_2d.1} parent=23 // pred_check
          %p270 = pneg %p62
        $region30: #{_pallas_copy_2d.1} parent=23 // pred_check_branch
          %272 = sbr.rel (%p270) target = $region32
        $region31: #{_pallas_copy_2d.1} parent=23 // pred_region
          %s273 = smul.u32 64, %s18
          %s275 = ssub.s32 8192, 8192
          %276 = vsyncadd %s266, %s275
          %s277 = smul.addr %s273, 128
          %s278 = scalar_lea.hbm %s1, %s277
          %s279 = sshll.u32 %s269, 4
          %s280 = int_to_ptr.vmem [resolvable:$true] %s279
          %285 = dma.vmem_to_hbm [thread:$0]  %s280, 8192, %s278, %s266, 128, 128, 8
        $region32: #{_pallas_copy_2d.1} parent=23 // pred_fallthru
          _
      $region24: #{_pallas_copy_2d.1} parent=5 // pred_fallthru
        _
      %p286 = scmp.le.s32.totalorder 2, %s13
      // Predicated region
      $region33: #{_pallas_copy_2d.1} parent=5 // pred_check
        %p287 = pneg %p286
      $region34: #{_pallas_copy_2d.1} parent=5 // pred_check_branch
        %289 = sbr.rel (%p287) target = $region36
      $region35: #{_pallas_copy_2d.1} parent=5 // pred_region
        %s290 = ssub.s32 %s13, 2
        // Predicated region
        $region37: #{_pallas_copy_2d.1} parent=35 // pred_check
          %p291 = pneg %p68
        $region38: #{_pallas_copy_2d.1} parent=35 // pred_check_branch
          %293 = sbr.rel (%p291) target = $region40
        $region39: #{_pallas_copy_2d.1} parent=35 // pred_region
          %s294 = sand.u32 %s53, 1
          %s295 = scalar_lea.sflag [#allocation4], %s294
          %s296 = sand.u32 %s53, 1
          %s297 = smul.addr %s296, 512
          %s298 = scalar_lea.vmem [#allocation5], %s297
          %299 = dma.done %s295, 8192
        $region40: #{_pallas_copy_2d.1} parent=35 // pred_fallthru
          _
      $region36: #{_pallas_copy_2d.1} parent=5 // pred_fallthru
        _
    $region6: #{_pallas_copy_2d.1} parent=1 // loop_footer
      %s17 = sadd.s32 1, %s13
    $region7: #{_pallas_copy_2d.1} parent=1 // loop_footer_branch
      %12 = sbr.rel target = $region3
    $region8: #{_pallas_copy_2d.1} parent=1 // loop_exit
      _
    %300 = vsyncpa [#allocation3], 1
    %s301 = scalar_lea.sflag [#allocation3], 1
    %302 = vsyncpa %s301, 1
    %303 = vsyncpa [#allocation4], 1
    %s304 = scalar_lea.sflag [#allocation4], 1
    %305 = vsyncpa %s304, 1

</llo_original>
